<compile_context>
chip_gen: v6e
topology: v6e:2x2x1
jax: 0.10.0
libtpu: 0.0.40
codegen_flags: <defaults>
</compile_context>

<pallas_src>
import jax
import jax.numpy as jnp
from jax.experimental import pallas as pl
from jax.experimental.pallas import tpu as pltpu


def _round_up(x: int, m: int) -> int:
    return ((x + m - 1) // m) * m


def _critic_kernel(s_ref, a_ref, w1s_ref, w1a_ref, b1_ref, w2_ref, b2_ref,
                   w3_ref, b3_ref, o_ref):
    mxu_dtype = w1s_ref.dtype                      # f32 or bf16 (set by wrapper)

    s = s_ref[...].astype(mxu_dtype)               # (S, TB)
    a = a_ref[...].astype(mxu_dtype)               # (A, TB)

    # Layer 1 with fused concat: h1 = W1_s^T @ s + W1_a^T @ a + b1  -> (H, TB)
    h1 = (jnp.dot(w1s_ref[...], s, preferred_element_type=jnp.float32)
          + jnp.dot(w1a_ref[...], a, preferred_element_type=jnp.float32)
          + b1_ref[...])                           # (H,1) lane-broadcast
    h1 = jnp.maximum(h1, 0.0)                      # ReLU in f32

    # Layer 2: h2 = W2^T @ h1 + b2  -> (H, TB)
    h2 = (jnp.dot(w2_ref[...], h1.astype(mxu_dtype),
                  preferred_element_type=jnp.float32)
          + b2_ref[...])
    h2 = jnp.maximum(h2, 0.0)                      # ReLU in f32

    # Layer 3 (H -> 1): VPU multiply + sublane reduction (no M=1 MXU matmul);
    # result is a lane-dense (1, TB) row, bias is a scalar from SMEM.
    q = jnp.sum(h2 * w3_ref[...], axis=0, keepdims=True) + b3_ref[0, 0]
    o_ref[...] = q.astype(o_ref.dtype)             # (1, TB) unmasked store


def _choose_batch_tile(batch: int, block_b: int) -> int:
    """Lane-dim batch tile: multiple of 128, or the full batch if B <= 128.
    Capped so the grid has >= 2 steps when possible (v7x dual TensorCore)."""
    if batch <= 128:
        return batch                               # full-array lane dim
    tb = max(128, (min(block_b, batch) // 128) * 128)
    half = _round_up(-(-batch // 2), 128)          # ceil(B/2) rounded to 128
    return max(128, min(tb, half))


def critic_forward(state, action, params, *, use_bf16=True, block_b=256):
    """Pallas forward pass. state: (B, S), action: (B, A) -> (B, 1) f32."""
    w1, b1, w2, b2, w3, b3 = params
    B, S = state.shape
    A = action.shape[-1]
    H = w1.shape[1]
    assert w1.shape == (S + A, H)

    mxu_dtype = jnp.bfloat16 if use_bf16 else jnp.float32

    # Transposed dataflow: batch lives in the lane dimension throughout.
    s_t = state.astype(jnp.float32).T              # (S, B)
    a_t = action.astype(jnp.float32).T             # (A, B)

    # Split + transposed weights: every operand is a full-array VMEM block,
    # so there is no in-kernel slicing / relayout.
    w1s_t = w1[:S, :].T.astype(mxu_dtype)          # (H, S)
    w1a_t = w1[S:, :].T.astype(mxu_dtype)          # (H, A)
    w2_t = w2.T.astype(mxu_dtype)                  # (H, H)
    b1c = b1.reshape(H, 1).astype(jnp.float32)     # (H, 1) column
    b2c = b2.reshape(H, 1).astype(jnp.float32)     # (H, 1) column
    w3c = w3.reshape(H, 1).astype(jnp.float32)     # (H, 1) column (VPU operand)
    b3s = b3.reshape(1, 1).astype(jnp.float32)     # scalar -> SMEM

    tb = _choose_batch_tile(B, block_b)
    grid = (pl.cdiv(B, tb),)

    flops = 2 * B * ((S + A) * H + H * H + H)
    w_itemsize = 2 if use_bf16 else 4
    bytes_accessed = (4 * B * (S + A + 1)
                      + (w1s_t.size + w1a_t.size + w2_t.size) * w_itemsize
                      + (b1c.size + b2c.size + w3c.size + b3s.size) * 4)

    out = pl.pallas_call(
        _critic_kernel,
        out_shape=jax.ShapeDtypeStruct((1, B), jnp.float32),
        grid=grid,
        in_specs=[
            pl.BlockSpec((S, tb), lambda i: (0, i)),            # state^T tile
            pl.BlockSpec((A, tb), lambda i: (0, i)),            # action^T tile
            pl.BlockSpec((H, S), lambda i: (0, 0)),              # W1_s^T (resident)
            pl.BlockSpec((H, A), lambda i: (0, 0)),              # W1_a^T (resident)
            pl.BlockSpec((H, 1), lambda i: (0, 0)),              # b1 column
            pl.BlockSpec((H, H), lambda i: (0, 0)),              # W2^T (resident)
            pl.BlockSpec((H, 1), lambda i: (0, 0)),              # b2 column
            pl.BlockSpec((H, 1), lambda i: (0, 0)),              # w3 column
            pl.BlockSpec(memory_space=pltpu.MemorySpace.SMEM),   # b3 scalar
        ],
        out_specs=pl.BlockSpec((1, tb), lambda i: (0, i)),       # lane-dense row
        compiler_params=pltpu.CompilerParams(
            dimension_semantics=("parallel",)),
        cost_estimate=pl.CostEstimate(
            flops=flops, transcendentals=0, bytes_accessed=bytes_accessed),
    )(s_t, a_t, w1s_t, w1a_t, b1c, w2_t, b2c, w3c, b3s)

    return out.reshape(B, 1)


def init_critic_params(key, state_dim, action_dim, hidden_size=64):
    """Deterministic synthetic init (PyTorch-Linear-style uniform fan-in bound)."""
    in_dim = state_dim + action_dim
    k = jax.random.split(key, 6)

    def linear(kw, kb, fan_in, fan_out):
        bound = 1.0 / jnp.sqrt(fan_in)
        w = jax.random.uniform(kw, (fan_in, fan_out), jnp.float32, -bound, bound)
        b = jax.random.uniform(kb, (1, fan_out), jnp.float32, -bound, bound)
        return w, b

    w1, b1 = linear(k[0], k[1], in_dim, hidden_size)
    w2, b2 = linear(k[2], k[3], hidden_size, hidden_size)
    w3, b3 = linear(k[4], k[5], hidden_size, 1)
    return (w1, b1, w2, b2, w3, b3)


def critic_reference(state, action, params):
    """Pure-JAX reference for correctness check."""
    w1, b1, w2, b2, w3, b3 = params
    x = jnp.concatenate([state, action], axis=-1)
    h1 = jnp.maximum(x @ w1 + b1, 0.0)
    h2 = jnp.maximum(h1 @ w2 + b2, 0.0)
    return h2 @ w3 + b3


if __name__ == "__main__":
    B, STATE_DIM, ACTION_DIM, HIDDEN = 8, 12, 4, 64

    key = jax.random.PRNGKey(0)
    k_s, k_a, k_p = jax.random.split(key, 3)
    state = jax.random.normal(k_s, (B, STATE_DIM), jnp.float32)
    action = jax.random.normal(k_a, (B, ACTION_DIM), jnp.float32)
    params = init_critic_params(k_p, STATE_DIM, ACTION_DIM, HIDDEN)

    q_ref = critic_reference(state, action, params)

    # f32 MXU operands: tight match against the pure-JAX reference.
    q_f32 = jax.block_until_ready(
        critic_forward(state, action, params, use_bf16=False))
    assert q_f32.shape == (B, 1), q_f32.shape
    assert jnp.allclose(q_f32, q_ref, atol=1e-5, rtol=1e-5), (q_f32, q_ref)

    # Default bf16 MXU operands (fast path on all generations): looser tolerance.
    q_bf16 = jax.block_until_ready(critic_forward(state, action, params))
    assert q_bf16.shape == (B, 1), q_bf16.shape
    assert jnp.allclose(q_bf16, q_ref, atol=5e-2, rtol=5e-2), (q_bf16, q_ref)

    # Larger batch that is not a multiple of the lane tile: exercises the
    # multi-step batch grid and the partial edge block on inputs/outputs.
    B2 = 200
    k_s2, k_a2 = jax.random.split(jax.random.PRNGKey(1), 2)
    state2 = jax.random.normal(k_s2, (B2, STATE_DIM), jnp.float32)
    action2 = jax.random.normal(k_a2, (B2, ACTION_DIM), jnp.float32)
    q2 = jax.block_until_ready(
        critic_forward(state2, action2, params, use_bf16=False))
    q2_ref = critic_reference(state2, action2, params)
    assert q2.shape == (B2, 1), q2.shape
    assert jnp.allclose(q2, q2_ref, atol=1e-5, rtol=1e-5), (q2, q2_ref)

    print("KERNEL_OK")
</pallas_src>

<mosaic_0001>
module attributes {stable_mosaic.version = 11 : i64} {
  func.func @_critic_kernel(%arg0: i32, %arg1: memref<12x8xf32, #tpu.memory_space<vmem>>, %arg2: memref<4x8xf32, #tpu.memory_space<vmem>>, %arg3: memref<64x12xf32, #tpu.memory_space<vmem>>, %arg4: memref<64x4xf32, #tpu.memory_space<vmem>>, %arg5: memref<64x1xf32, #tpu.memory_space<vmem>>, %arg6: memref<64x64xf32, #tpu.memory_space<vmem>>, %arg7: memref<64x1xf32, #tpu.memory_space<vmem>>, %arg8: memref<64x1xf32, #tpu.memory_space<vmem>>, %arg9: memref<1x1xf32, #tpu.memory_space<smem>>, %arg10: memref<1x8xf32, #tpu.memory_space<vmem>>) attributes {dimension_semantics = [#tpu.dimension_semantics<parallel>], iteration_bounds = array<i64: 1>, scalar_prefetch = 0 : i64, scratch_operands = 0 : i64, tpu.core_type = #tpu.core_type<tc>, window_params = [{transform_indices = @transform_0, window_bounds = array<i64: 12, 8>}, {transform_indices = @transform_1, window_bounds = array<i64: 4, 8>}, {pipeline_mode = #tpu.pipeline_mode<synchronous>, transform_indices = @transform_2, window_bounds = array<i64: 64, 12>}, {pipeline_mode = #tpu.pipeline_mode<synchronous>, transform_indices = @transform_3, window_bounds = array<i64: 64, 4>}, {pipeline_mode = #tpu.pipeline_mode<synchronous>, transform_indices = @transform_4, window_bounds = array<i64: 64, 1>}, {pipeline_mode = #tpu.pipeline_mode<synchronous>, transform_indices = @transform_5, window_bounds = array<i64: 64, 64>}, {pipeline_mode = #tpu.pipeline_mode<synchronous>, transform_indices = @transform_6, window_bounds = array<i64: 64, 1>}, {pipeline_mode = #tpu.pipeline_mode<synchronous>, transform_indices = @transform_7, window_bounds = array<i64: 64, 1>}, {transform_indices = @transform_8, window_bounds = array<i64: 1, 1>}, {transform_indices = @transform_9, window_bounds = array<i64: 1, 8>}]} {
    %c0 = arith.constant 0 : index
    %c0_0 = arith.constant 0 : index
    %0 = vector.load %arg1[%c0, %c0_0] : memref<12x8xf32, #tpu.memory_space<vmem>>, vector<12x8xf32>
    %c0_1 = arith.constant 0 : index
    %c0_2 = arith.constant 0 : index
    %1 = vector.load %arg2[%c0_1, %c0_2] : memref<4x8xf32, #tpu.memory_space<vmem>>, vector<4x8xf32>
    %c0_3 = arith.constant 0 : index
    %c0_4 = arith.constant 0 : index
    %2 = vector.load %arg3[%c0_3, %c0_4] : memref<64x12xf32, #tpu.memory_space<vmem>>, vector<64x12xf32>
    %cst = arith.constant dense<0.000000e+00> : vector<64x8xf32>
    %3 = tpu.matmul %2, %0, %cst {dimension_numbers = #tpu.dot_dimension_numbers<[1], [0], [0], [1], [0, 0, 1, 1], [], []>} : vector<64x12xf32>, vector<12x8xf32>, vector<64x8xf32> -> vector<64x8xf32>
    %c0_5 = arith.constant 0 : index
    %c0_6 = arith.constant 0 : index
    %4 = vector.load %arg4[%c0_5, %c0_6] : memref<64x4xf32, #tpu.memory_space<vmem>>, vector<64x4xf32>
    %cst_7 = arith.constant dense<0.000000e+00> : vector<64x8xf32>
    %5 = tpu.matmul %4, %1, %cst_7 {dimension_numbers = #tpu.dot_dimension_numbers<[1], [0], [0], [1], [0, 0, 1, 1], [], []>} : vector<64x4xf32>, vector<4x8xf32>, vector<64x8xf32> -> vector<64x8xf32>
    %6 = arith.addf %3, %5 : vector<64x8xf32>
    %c0_8 = arith.constant 0 : index
    %c0_9 = arith.constant 0 : index
    %7 = vector.load %arg5[%c0_8, %c0_9] : memref<64x1xf32, #tpu.memory_space<vmem>>, vector<64x1xf32>
    %8 = vector.broadcast %7 : vector<64x1xf32> to vector<64x8xf32>
    %9 = arith.addf %6, %8 : vector<64x8xf32>
    %cst_10 = arith.constant 0.000000e+00 : f32
    %10 = vector.broadcast %cst_10 : f32 to vector<64x8xf32>
    %11 = arith.maximumf %9, %10 : vector<64x8xf32>
    %c0_11 = arith.constant 0 : index
    %c0_12 = arith.constant 0 : index
    %12 = vector.load %arg6[%c0_11, %c0_12] : memref<64x64xf32, #tpu.memory_space<vmem>>, vector<64x64xf32>
    %cst_13 = arith.constant dense<0.000000e+00> : vector<64x8xf32>
    %13 = tpu.matmul %12, %11, %cst_13 {dimension_numbers = #tpu.dot_dimension_numbers<[1], [0], [0], [1], [0, 0, 1, 1], [], []>} : vector<64x64xf32>, vector<64x8xf32>, vector<64x8xf32> -> vector<64x8xf32>
    %c0_14 = arith.constant 0 : index
    %c0_15 = arith.constant 0 : index
    %14 = vector.load %arg7[%c0_14, %c0_15] : memref<64x1xf32, #tpu.memory_space<vmem>>, vector<64x1xf32>
    %15 = vector.broadcast %14 : vector<64x1xf32> to vector<64x8xf32>
    %16 = arith.addf %13, %15 : vector<64x8xf32>
    %cst_16 = arith.constant 0.000000e+00 : f32
    %17 = vector.broadcast %cst_16 : f32 to vector<64x8xf32>
    %18 = arith.maximumf %16, %17 : vector<64x8xf32>
    %c0_17 = arith.constant 0 : index
    %c0_18 = arith.constant 0 : index
    %19 = vector.load %arg8[%c0_17, %c0_18] : memref<64x1xf32, #tpu.memory_space<vmem>>, vector<64x1xf32>
    %20 = vector.broadcast %19 : vector<64x1xf32> to vector<64x8xf32>
    %21 = arith.mulf %18, %20 : vector<64x8xf32>
    %cst_19 = arith.constant dense<0.000000e+00> : vector<8xf32>
    %22 = vector.multi_reduction <add>, %21, %cst_19 [0] : vector<64x8xf32> to vector<8xf32>
    %23 = vector.shape_cast %22 : vector<8xf32> to vector<1x8xf32>
    %c0_20 = arith.constant 0 : index
    %c0_21 = arith.constant 0 : index
    %24 = memref.load %arg9[%c0_20, %c0_21] : memref<1x1xf32, #tpu.memory_space<smem>>
    %25 = vector.broadcast %24 : f32 to vector<1x8xf32>
    %26 = arith.addf %23, %25 : vector<1x8xf32>
    %c0_22 = arith.constant 0 : index
    %c0_23 = arith.constant 0 : index
    %27 = vector.load %arg10[%c0_22, %c0_23] : memref<1x8xf32, #tpu.memory_space<vmem>>, vector<1x8xf32>
    tpu.vector_store %arg10[%c0_22, %c0_23], %26 {strides = array<i32>} : memref<1x8xf32, #tpu.memory_space<vmem>>, vector<1x8xf32>,
    return
  }
  func.func @transform_0(%arg0: i32) -> (i32, i32) {
    %c0_i32 = arith.constant 0 : i32
    %c0_i32_0 = arith.constant 0 : i32
    return %c0_i32, %arg0 : i32, i32
  }
  func.func @transform_1(%arg0: i32) -> (i32, i32) {
    %c0_i32 = arith.constant 0 : i32
    %c0_i32_0 = arith.constant 0 : i32
    return %c0_i32, %arg0 : i32, i32
  }
  func.func @transform_2(%arg0: i32) -> (i32, i32) {
    %c0_i32 = arith.constant 0 : i32
    %c0_i32_0 = arith.constant 0 : i32
    %c0_i32_1 = arith.constant 0 : i32
    return %c0_i32, %c0_i32_0 : i32, i32
  }
  func.func @transform_3(%arg0: i32) -> (i32, i32) {
    %c0_i32 = arith.constant 0 : i32
    %c0_i32_0 = arith.constant 0 : i32
    %c0_i32_1 = arith.constant 0 : i32
    return %c0_i32, %c0_i32_0 : i32, i32
  }
  func.func @transform_4(%arg0: i32) -> (i32, i32) {
    %c0_i32 = arith.constant 0 : i32
    %c0_i32_0 = arith.constant 0 : i32
    %c0_i32_1 = arith.constant 0 : i32
    return %c0_i32, %c0_i32_0 : i32, i32
  }
  func.func @transform_5(%arg0: i32) -> (i32, i32) {
    %c0_i32 = arith.constant 0 : i32
    %c0_i32_0 = arith.constant 0 : i32
    %c0_i32_1 = arith.constant 0 : i32
    return %c0_i32, %c0_i32_0 : i32, i32
  }
  func.func @transform_6(%arg0: i32) -> (i32, i32) {
    %c0_i32 = arith.constant 0 : i32
    %c0_i32_0 = arith.constant 0 : i32
    %c0_i32_1 = arith.constant 0 : i32
    return %c0_i32, %c0_i32_0 : i32, i32
  }
  func.func @transform_7(%arg0: i32) -> (i32, i32) {
    %c0_i32 = arith.constant 0 : i32
    %c0_i32_0 = arith.constant 0 : i32
    %c0_i32_1 = arith.constant 0 : i32
    return %c0_i32, %c0_i32_0 : i32, i32
  }
  func.func @transform_8(%arg0: i32) -> (i32, i32) {
    %c0_i32 = arith.constant 0 : i32
    %c0_i32_0 = arith.constant 0 : i32
    %c0_i32_1 = arith.constant 0 : i32
    return %c0_i32, %c0_i32_0 : i32, i32
  }
  func.func @transform_9(%arg0: i32) -> (i32, i32) {
    %c0_i32 = arith.constant 0 : i32
    %c0_i32_0 = arith.constant 0 : i32
    return %c0_i32, %arg0 : i32, i32
  }
}

</mosaic_0001>

<llo_original>
// kernel: tpu_custom_call.1
$region0: #{tpu_custom_call.1}
  #allocation0 [shape = 'u32[]', space=smem, size = 0x4, offset = 0x4, fixed_abs, tag = 'smem constant byte address 0x4 - core index']
  #allocation1 [shape = 'u32[144,128]{1,0:T(1,128)}', space=vmem, size = 0x12000, scoped, tag = 'internal scratch']
  #allocation2 [shape = 'f32[1,1]{1,0:T(1,128)S(6)}', space=smem, size = 0x200, scoped, tag = 'scoped memory for tpu_custom_call.1']
  %s0 = inlined_call_operand.vmem [shape: f32[12,8], index: 0, kind: input, shape index: {}]
  %s1 = inlined_call_operand.vmem [shape: f32[4,8], index: 1, kind: input, shape index: {}]
  %s2 = inlined_call_operand.vmem [shape: f32[64,12], index: 2, kind: input, shape index: {}]
  %s3 = inlined_call_operand.vmem [shape: f32[64,4], index: 3, kind: input, shape index: {}]
  %s4 = inlined_call_operand.vmem [shape: f32[64,1], index: 4, kind: input, shape index: {}]
  %s5 = inlined_call_operand.vmem [shape: f32[64,64], index: 5, kind: input, shape index: {}]
  %s6 = inlined_call_operand.vmem [shape: f32[64,1], index: 6, kind: input, shape index: {}]
  %s7 = inlined_call_operand.vmem [shape: f32[64,1], index: 7, kind: input, shape index: {}]
  %s8 = inlined_call_operand.<no memory space> [shape: f32[1,1], index: 8, kind: input, shape index: {}]
  %s9 = inlined_call_operand.hbm [shape: f32[1,8], index: 9, kind: output, shape index: {}]
  %s10 = sld [smem:[#allocation0]]
  $region46: #{tpu_custom_call.1} parent=0
    _
  %s12 = ssub.s32 1, %s10
  %s13 = scalar_select 0, %s12, %s10
  %14 = sst [smem:[#allocation2]] %s8
  $region1: #{tpu_custom_call.1} parent=0
    #allocation3 [shape = 'u8[512]{0}', space=vmem, size = 0x400, scoped, tag = 'output window, operand 0, single buffered']
    #allocation4 [shape = 's32[1]{0}', space=sflag, size = 0x4, scoped, tag = 'scoped memory for tpu_custom_call.1']
    %15 = vsyncpa [#allocation4], 0
    // Predicated region
    $region2: #{tpu_custom_call.1} parent=1 // pred_check
      _
    $region3: #{tpu_custom_call.1} parent=1 // pred_check_branch
      %17 = sbr.rel (0) target = $region5
    $region4: #{tpu_custom_call.1} parent=1 // pred_region
      _
    $region5: #{tpu_custom_call.1} parent=1 // pred_fallthru
      _
    // Predicated region
    $region6: #{tpu_custom_call.1} parent=1 // pred_check
      _
    $region7: #{tpu_custom_call.1} parent=1 // pred_check_branch
      %19 = sbr.rel (0) target = $region9
    $region8: #{tpu_custom_call.1} parent=1 // pred_region
      _
    $region9: #{tpu_custom_call.1} parent=1 // pred_fallthru
      _
    // Predicated region
    $region10: #{tpu_custom_call.1} parent=1 // pred_check
      _
    $region11: #{tpu_custom_call.1} parent=1 // pred_check_branch
      %21 = sbr.rel (0) target = $region13
    $region12: #{tpu_custom_call.1} parent=1 // pred_region
      _
    $region13: #{tpu_custom_call.1} parent=1 // pred_fallthru
      _
    // Predicated region
    $region14: #{tpu_custom_call.1} parent=1 // pred_check
      _
    $region15: #{tpu_custom_call.1} parent=1 // pred_check_branch
      %23 = sbr.rel (0) target = $region17
    $region16: #{tpu_custom_call.1} parent=1 // pred_region
      _
    $region17: #{tpu_custom_call.1} parent=1 // pred_fallthru
      _
    // Predicated region
    $region18: #{tpu_custom_call.1} parent=1 // pred_check
      _
    $region19: #{tpu_custom_call.1} parent=1 // pred_check_branch
      %25 = sbr.rel (0) target = $region21
    $region20: #{tpu_custom_call.1} parent=1 // pred_region
      _
    $region21: #{tpu_custom_call.1} parent=1 // pred_fallthru
      _
    // Predicated region
    $region22: #{tpu_custom_call.1} parent=1 // pred_check
      _
    $region23: #{tpu_custom_call.1} parent=1 // pred_check_branch
      %27 = sbr.rel (0) target = $region25
    $region24: #{tpu_custom_call.1} parent=1 // pred_region
      _
    $region25: #{tpu_custom_call.1} parent=1 // pred_fallthru
      _
    // Predicated region
    $region26: #{tpu_custom_call.1} parent=1 // pred_check
      _
    $region27: #{tpu_custom_call.1} parent=1 // pred_check_branch
      %29 = sbr.rel (0) target = $region29
    $region28: #{tpu_custom_call.1} parent=1 // pred_region
      _
    $region29: #{tpu_custom_call.1} parent=1 // pred_fallthru
      _
    // Predicated region
    $region30: #{tpu_custom_call.1} parent=1 // pred_check
      _
    $region31: #{tpu_custom_call.1} parent=1 // pred_check_branch
      %31 = sbr.rel (0) target = $region33
    $region32: #{tpu_custom_call.1} parent=1 // pred_region
      _
    $region33: #{tpu_custom_call.1} parent=1 // pred_fallthru
      _
    // Predicated region
    $region34: #{tpu_custom_call.1} parent=1 // pred_check
      _
    $region35: #{tpu_custom_call.1} parent=1 // pred_check_branch
      %33 = sbr.rel (0) target = $region37
    $region36: #{tpu_custom_call.1} parent=1 // pred_region
      _
    $region37: #{tpu_custom_call.1} parent=1 // pred_fallthru
      _
    %v34 = vld [vmem:[%s0] sm:$0xff]
    %v35 = vld [vmem:[%s0 + $0x8] sm:$0xf]
    %v36 = vld [vmem:[%s1] sm:$0xf]
    %v37 = vld [vmem:[%s2] sm:$0xff]
    %v38 = vld [vmem:[%s2 + $0x8] sm:$0xff]
    %v39 = vld [vmem:[%s2 + $0x10] sm:$0xff]
    %v40 = vld [vmem:[%s2 + $0x18] sm:$0xff]
    %v41 = vld [vmem:[%s2 + $0x20] sm:$0xff]
    %v42 = vld [vmem:[%s2 + $0x28] sm:$0xff]
    %v43 = vld [vmem:[%s2 + $0x30] sm:$0xff]
    %v44 = vld [vmem:[%s2 + $0x38] sm:$0xff]
    %v45 = vld [vmem:[%s3] sm:$0xff]
    %v46 = vld [vmem:[%s3 + $0x8] sm:$0xff]
    %v47 = vld [vmem:[%s3 + $0x10] sm:$0xff]
    %v48 = vld [vmem:[%s3 + $0x18] sm:$0xff]
    %v49 = vld [vmem:[%s3 + $0x20] sm:$0xff]
    %v50 = vld [vmem:[%s3 + $0x28] sm:$0xff]
    %v51 = vld [vmem:[%s3 + $0x30] sm:$0xff]
    %v52 = vld [vmem:[%s3 + $0x38] sm:$0xff]
    %vm53 = vcmask 31744
    %v55 = vsel %vm53, %v45, 0
    %v58 = vsel %vm53, %v46, 0
    %v61 = vsel %vm53, %v47, 0
    %v64 = vsel %vm53, %v48, 0
    %v67 = vsel %vm53, %v49, 0
    %v70 = vsel %vm53, %v50, 0
    %v73 = vsel %vm53, %v51, 0
    %v76 = vsel %vm53, %v52, 0
    %vm78 = vcmask 1043456
    %v80 = vsel %vm78, %v36, 0
    %82 = vmatprep.subr.mxu0 0.0
    %83 = vmatpush1.msra.mxu0 0.0
    %84 = vmatprep.subr.mxu0 0.0
    %85 = vmatpush1.msra.mxu0 0.0
    %86 = vmatprep.subr.mxu0 0.0
    %87 = vmatpush1.msra.mxu0 0.0
    %88 = vmatprep.subr.mxu0 0.0
    %89 = vmatpush1.msra.mxu0 0.0
    %90 = vmatprep.subr.mxu0 0.0
    %91 = vmatpush1.msra.mxu0 0.0
    %92 = vmatprep.subr.mxu0 0.0
    %93 = vmatpush1.msra.mxu0 0.0
    %94 = vmatprep.subr.mxu0 0.0
    %95 = vmatpush1.msra.mxu0 0.0
    %96 = vmatprep.subr.mxu0 0.0
    %97 = vmatpush1.msra.mxu0 0.0
    %98 = vmatprep.subr.mxu0 0.0
    %99 = vmatpush1.msra.mxu0 0.0
    %100 = vmatprep.subr.mxu0 0.0
    %101 = vmatpush1.msra.mxu0 0.0
    %102 = vmatprep.subr.mxu0 0.0
    %103 = vmatpush1.msra.mxu0 0.0
    %104 = vmatprep.subr.mxu0 0.0
    %105 = vmatpush1.msra.mxu0 0.0
    %106 = vmatprep.subr.mxu0 0.0
    %107 = vmatpush1.msra.mxu0 0.0
    %108 = vmatprep.subr.mxu0 0.0
    %109 = vmatpush1.msra.mxu0 0.0
    %110 = vmatprep.subr.mxu0 0.0
    %111 = vmatpush1.msra.mxu0 0.0
    %112 = vmatprep.subr.mxu0 0.0
    %113 = vmatpush1.msra.mxu0 %v80
    %114 = vmatprep.subr.mxu0 0.0
    %115 = vmatpush2.msra.mxu0 0.0
    %116 = vmatprep.subr.mxu0 0.0
    %117 = vmatpush2.msra.mxu0 0.0
    %118 = vmatprep.subr.mxu0 0.0
    %119 = vmatpush2.msra.mxu0 0.0
    %120 = vmatprep.subr.mxu0 0.0
    %121 = vmatpush2.msra.mxu0 0.0
    %122 = vmatprep.subr.mxu0 0.0
    %123 = vmatpush2.msra.mxu0 0.0
    %124 = vmatprep.subr.mxu0 0.0
    %125 = vmatpush2.msra.mxu0 0.0
    %126 = vmatprep.subr.mxu0 0.0
    %127 = vmatpush2.msra.mxu0 0.0
    %128 = vmatprep.subr.mxu0 0.0
    %129 = vmatpush2.msra.mxu0 0.0
    %130 = vmatprep.subr.mxu0 0.0
    %131 = vmatpush2.msra.mxu0 0.0
    %132 = vmatprep.subr.mxu0 0.0
    %133 = vmatpush2.msra.mxu0 0.0
    %134 = vmatprep.subr.mxu0 0.0
    %135 = vmatpush2.msra.mxu0 0.0
    %136 = vmatprep.subr.mxu0 0.0
    %137 = vmatpush2.msra.mxu0 0.0
    %138 = vmatprep.subr.mxu0 0.0
    %139 = vmatpush2.msra.mxu0 0.0
    %140 = vmatprep.subr.mxu0 0.0
    %141 = vmatpush2.msra.mxu0 0.0
    %142 = vmatprep.subr.mxu0 0.0
    %143 = vmatpush2.msra.mxu0 0.0
    %144 = vmatprep.subr.mxu0 0.0
    %145 = vmatpush2.msra.mxu0 0.0
    %146 = vmatprep.mubr.f32.mxu0 0.0
    %147 = vmatmul.mubr.f32.gmra.mxu0 %v55
    %v148 = vpop.f32.mrf.mxu0
    %v149 = vadd.f32 0.0, %v148
    %v150 = vpop.f32.mrf.mxu0
    %151 = vmatprep.mubr.f32.mxu0 0.0
    %152 = vmatmul.mubr.f32.gmra.mxu0 %v58
    %v153 = vpop.f32.mrf.mxu0
    %v154 = vadd.f32 0.0, %v153
    %v155 = vpop.f32.mrf.mxu0
    %156 = vmatprep.mubr.f32.mxu0 0.0
    %157 = vmatmul.mubr.f32.gmra.mxu0 %v61
    %v158 = vpop.f32.mrf.mxu0
    %v159 = vadd.f32 0.0, %v158
    %v160 = vpop.f32.mrf.mxu0
    %161 = vmatprep.mubr.f32.mxu0 0.0
    %162 = vmatmul.mubr.f32.gmra.mxu0 %v64
    %v163 = vpop.f32.mrf.mxu0
    %v164 = vadd.f32 0.0, %v163
    %v165 = vpop.f32.mrf.mxu0
    %166 = vmatprep.mubr.f32.mxu0 0.0
    %167 = vmatmul.mubr.f32.gmra.mxu0 %v67
    %v168 = vpop.f32.mrf.mxu0
    %v169 = vadd.f32 0.0, %v168
    %v170 = vpop.f32.mrf.mxu0
    %171 = vmatprep.mubr.f32.mxu0 0.0
    %172 = vmatmul.mubr.f32.gmra.mxu0 %v70
    %v173 = vpop.f32.mrf.mxu0
    %v174 = vadd.f32 0.0, %v173
    %v175 = vpop.f32.mrf.mxu0
    %176 = vmatprep.mubr.f32.mxu0 0.0
    %177 = vmatmul.mubr.f32.gmra.mxu0 %v73
    %v178 = vpop.f32.mrf.mxu0
    %v179 = vadd.f32 0.0, %v178
    %v180 = vpop.f32.mrf.mxu0
    %181 = vmatprep.mubr.f32.mxu0 0.0
    %182 = vmatmul.mubr.f32.gmra.mxu0 %v76
    %v183 = vpop.f32.mrf.mxu0
    %v184 = vadd.f32 0.0, %v183
    %v185 = vpop.f32.mrf.mxu0
    %186 = vdwg.mxu0
    %vm187 = vcmask 97280
    %v189 = vsel %vm187, %v37, 0
    %v192 = vsel %vm187, %v38, 0
    %v195 = vsel %vm187, %v39, 0
    %v198 = vsel %vm187, %v40, 0
    %v201 = vsel %vm187, %v41, 0
    %v204 = vsel %vm187, %v42, 0
    %v207 = vsel %vm187, %v43, 0
    %v210 = vsel %vm187, %v44, 0
    %v213 = vsel %vm78, %v35, 0
    %215 = vmatprep.subr.mxu0 0.0
    %216 = vmatpush1.msra.mxu0 0.0
    %217 = vmatprep.subr.mxu0 0.0
    %218 = vmatpush1.msra.mxu0 0.0
    %219 = vmatprep.subr.mxu0 0.0
    %220 = vmatpush1.msra.mxu0 0.0
    %221 = vmatprep.subr.mxu0 0.0
    %222 = vmatpush1.msra.mxu0 0.0
    %223 = vmatprep.subr.mxu0 0.0
    %224 = vmatpush1.msra.mxu0 0.0
    %225 = vmatprep.subr.mxu0 0.0
    %226 = vmatpush1.msra.mxu0 0.0
    %227 = vmatprep.subr.mxu0 0.0
    %228 = vmatpush1.msra.mxu0 0.0
    %229 = vmatprep.subr.mxu0 0.0
    %230 = vmatpush1.msra.mxu0 0.0
    %231 = vmatprep.subr.mxu0 0.0
    %232 = vmatpush1.msra.mxu0 0.0
    %233 = vmatprep.subr.mxu0 0.0
    %234 = vmatpush1.msra.mxu0 0.0
    %235 = vmatprep.subr.mxu0 0.0
    %236 = vmatpush1.msra.mxu0 0.0
    %237 = vmatprep.subr.mxu0 0.0
    %238 = vmatpush1.msra.mxu0 0.0
    %239 = vmatprep.subr.mxu0 0.0
    %240 = vmatpush1.msra.mxu0 0.0
    %241 = vmatprep.subr.mxu0 0.0
    %242 = vmatpush1.msra.mxu0 0.0
    %243 = vmatprep.subr.mxu0 0.0
    %244 = vmatpush1.msra.mxu0 %v213
    %245 = vmatprep.subr.mxu0 0.0
    %246 = vmatpush1.msra.mxu0 %v34
    %247 = vmatprep.subr.mxu0 0.0
    %248 = vmatpush2.msra.mxu0 0.0
    %249 = vmatprep.subr.mxu0 0.0
    %250 = vmatpush2.msra.mxu0 0.0
    %251 = vmatprep.subr.mxu0 0.0
    %252 = vmatpush2.msra.mxu0 0.0
    %253 = vmatprep.subr.mxu0 0.0
    %254 = vmatpush2.msra.mxu0 0.0
    %255 = vmatprep.subr.mxu0 0.0
    %256 = vmatpush2.msra.mxu0 0.0
    %257 = vmatprep.subr.mxu0 0.0
    %258 = vmatpush2.msra.mxu0 0.0
    %259 = vmatprep.subr.mxu0 0.0
    %260 = vmatpush2.msra.mxu0 0.0
    %261 = vmatprep.subr.mxu0 0.0
    %262 = vmatpush2.msra.mxu0 0.0
    %263 = vmatprep.subr.mxu0 0.0
    %264 = vmatpush2.msra.mxu0 0.0
    %265 = vmatprep.subr.mxu0 0.0
    %266 = vmatpush2.msra.mxu0 0.0
    %267 = vmatprep.subr.mxu0 0.0
    %268 = vmatpush2.msra.mxu0 0.0
    %269 = vmatprep.subr.mxu0 0.0
    %270 = vmatpush2.msra.mxu0 0.0
    %271 = vmatprep.subr.mxu0 0.0
    %272 = vmatpush2.msra.mxu0 0.0
    %273 = vmatprep.subr.mxu0 0.0
    %274 = vmatpush2.msra.mxu0 0.0
    %275 = vmatprep.subr.mxu0 0.0
    %276 = vmatpush2.msra.mxu0 0.0
    %277 = vmatprep.subr.mxu0 0.0
    %278 = vmatpush2.msra.mxu0 0.0
    %279 = vmatprep.mubr.f32.mxu0 0.0
    %280 = vmatmul.mubr.f32.gmra.mxu0 %v189
    %v281 = vpop.f32.mrf.mxu0
    %v282 = vadd.f32 %v149, %v281
    %v283 = vpop.f32.mrf.mxu0
    %284 = vmatprep.mubr.f32.mxu0 0.0
    %285 = vmatmul.mubr.f32.gmra.mxu0 %v192
    %v286 = vpop.f32.mrf.mxu0
    %v287 = vadd.f32 %v154, %v286
    %v288 = vpop.f32.mrf.mxu0
    %289 = vmatprep.mubr.f32.mxu0 0.0
    %290 = vmatmul.mubr.f32.gmra.mxu0 %v195
    %v291 = vpop.f32.mrf.mxu0
    %v292 = vadd.f32 %v159, %v291
    %v293 = vpop.f32.mrf.mxu0
    %294 = vmatprep.mubr.f32.mxu0 0.0
    %295 = vmatmul.mubr.f32.gmra.mxu0 %v198
    %v296 = vpop.f32.mrf.mxu0
    %v297 = vadd.f32 %v164, %v296
    %v298 = vpop.f32.mrf.mxu0
    %299 = vmatprep.mubr.f32.mxu0 0.0
    %300 = vmatmul.mubr.f32.gmra.mxu0 %v201
    %v301 = vpop.f32.mrf.mxu0
    %v302 = vadd.f32 %v169, %v301
    %v303 = vpop.f32.mrf.mxu0
    %304 = vmatprep.mubr.f32.mxu0 0.0
    %305 = vmatmul.mubr.f32.gmra.mxu0 %v204
    %v306 = vpop.f32.mrf.mxu0
    %v307 = vadd.f32 %v174, %v306
    %v308 = vpop.f32.mrf.mxu0
    %309 = vmatprep.mubr.f32.mxu0 0.0
    %310 = vmatmul.mubr.f32.gmra.mxu0 %v207
    %v311 = vpop.f32.mrf.mxu0
    %v312 = vadd.f32 %v179, %v311
    %v313 = vpop.f32.mrf.mxu0
    %314 = vmatprep.mubr.f32.mxu0 0.0
    %315 = vmatmul.mubr.f32.gmra.mxu0 %v210
    %v316 = vpop.f32.mrf.mxu0
    %v317 = vadd.f32 %v184, %v316
    %v318 = vpop.f32.mrf.mxu0
    %319 = vdwg.mxu0
    %v320 = vld [vmem:[%s4] sm:$0xff]
    %v321 = vld [vmem:[%s4 + $0x8] sm:$0xff]
    %v322 = vld [vmem:[%s4 + $0x10] sm:$0xff]
    %v323 = vld [vmem:[%s4 + $0x18] sm:$0xff]
    %v324 = vld [vmem:[%s4 + $0x20] sm:$0xff]
    %v325 = vld [vmem:[%s4 + $0x28] sm:$0xff]
    %v326 = vld [vmem:[%s4 + $0x30] sm:$0xff]
    %v327 = vld [vmem:[%s4 + $0x38] sm:$0xff]
    %329 = vset.pattern.permute.xlu0 0
    %330 = vperm.xlu0 %329, %v320
    %v331 = vpop.permute.xlu0 %330
    %334 = vset.pattern.permute.xlu0 0
    %335 = vperm.xlu0 %334, %v321
    %v336 = vpop.permute.xlu0 %335
    %339 = vset.pattern.permute.xlu0 0
    %340 = vperm.xlu0 %339, %v322
    %v341 = vpop.permute.xlu0 %340
    %344 = vset.pattern.permute.xlu0 0
    %345 = vperm.xlu0 %344, %v323
    %v346 = vpop.permute.xlu0 %345
    %349 = vset.pattern.permute.xlu0 0
    %350 = vperm.xlu0 %349, %v324
    %v351 = vpop.permute.xlu0 %350
    %354 = vset.pattern.permute.xlu0 0
    %355 = vperm.xlu0 %354, %v325
    %v356 = vpop.permute.xlu0 %355
    %359 = vset.pattern.permute.xlu0 0
    %360 = vperm.xlu0 %359, %v326
    %v361 = vpop.permute.xlu0 %360
    %364 = vset.pattern.permute.xlu0 0
    %365 = vperm.xlu0 %364, %v327
    %v366 = vpop.permute.xlu0 %365
    %v368 = vadd.f32 %v282, %v331
    %v369 = vadd.f32 %v287, %v336
    %v370 = vadd.f32 %v292, %v341
    %v371 = vadd.f32 %v297, %v346
    %v372 = vadd.f32 %v302, %v351
    %v373 = vadd.f32 %v307, %v356
    %v374 = vadd.f32 %v312, %v361
    %v375 = vadd.f32 %v317, %v366
    %v376 = vmax.f32 %v368, 0.0
    %v377 = vmax.f32 %v369, 0.0
    %v378 = vmax.f32 %v370, 0.0
    %v379 = vmax.f32 %v371, 0.0
    %v380 = vmax.f32 %v372, 0.0
    %v381 = vmax.f32 %v373, 0.0
    %v382 = vmax.f32 %v374, 0.0
    %v383 = vmax.f32 %v375, 0.0
    %v384 = vld [vmem:[%s5] sm:$0xff]
    %v385 = vld [vmem:[%s5 + $0x8] sm:$0xff]
    %v386 = vld [vmem:[%s5 + $0x10] sm:$0xff]
    %v387 = vld [vmem:[%s5 + $0x18] sm:$0xff]
    %v388 = vld [vmem:[%s5 + $0x20] sm:$0xff]
    %v389 = vld [vmem:[%s5 + $0x28] sm:$0xff]
    %v390 = vld [vmem:[%s5 + $0x30] sm:$0xff]
    %v391 = vld [vmem:[%s5 + $0x38] sm:$0xff]
    %v392 = vld [vmem:[%s6] sm:$0xff]
    %v393 = vld [vmem:[%s6 + $0x8] sm:$0xff]
    %v394 = vld [vmem:[%s6 + $0x10] sm:$0xff]
    %v395 = vld [vmem:[%s6 + $0x18] sm:$0xff]
    %v396 = vld [vmem:[%s6 + $0x20] sm:$0xff]
    %v397 = vld [vmem:[%s6 + $0x28] sm:$0xff]
    %v398 = vld [vmem:[%s6 + $0x30] sm:$0xff]
    %v399 = vld [vmem:[%s6 + $0x38] sm:$0xff]
    %401 = vset.pattern.permute.xlu0 0
    %402 = vperm.xlu0 %401, %v392
    %v403 = vpop.permute.xlu0 %402
    %406 = vset.pattern.permute.xlu0 0
    %407 = vperm.xlu0 %406, %v393
    %v408 = vpop.permute.xlu0 %407
    %411 = vset.pattern.permute.xlu0 0
    %412 = vperm.xlu0 %411, %v394
    %v413 = vpop.permute.xlu0 %412
    %416 = vset.pattern.permute.xlu0 0
    %417 = vperm.xlu0 %416, %v395
    %v418 = vpop.permute.xlu0 %417
    %421 = vset.pattern.permute.xlu0 0
    %422 = vperm.xlu0 %421, %v396
    %v423 = vpop.permute.xlu0 %422
    %426 = vset.pattern.permute.xlu0 0
    %427 = vperm.xlu0 %426, %v397
    %v428 = vpop.permute.xlu0 %427
    %431 = vset.pattern.permute.xlu0 0
    %432 = vperm.xlu0 %431, %v398
    %v433 = vpop.permute.xlu0 %432
    %436 = vset.pattern.permute.xlu0 0
    %437 = vperm.xlu0 %436, %v399
    %v438 = vpop.permute.xlu0 %437
    %vm440 = vcmask 523264
    %v442 = vsel %vm440, %v384, 0
    %v445 = vsel %vm440, %v385, 0
    %v448 = vsel %vm440, %v386, 0
    %v451 = vsel %vm440, %v387, 0
    %v454 = vsel %vm440, %v388, 0
    %v457 = vsel %vm440, %v389, 0
    %v460 = vsel %vm440, %v390, 0
    %v463 = vsel %vm440, %v391, 0
    %465 = vmatprep.subr.mxu0 0.0
    %466 = vmatpush1.msra.mxu0 0.0
    %467 = vmatprep.subr.mxu0 0.0
    %468 = vmatpush1.msra.mxu0 0.0
    %469 = vmatprep.subr.mxu0 0.0
    %470 = vmatpush1.msra.mxu0 0.0
    %471 = vmatprep.subr.mxu0 0.0
    %472 = vmatpush1.msra.mxu0 0.0
    %473 = vmatprep.subr.mxu0 0.0
    %474 = vmatpush1.msra.mxu0 0.0
    %475 = vmatprep.subr.mxu0 0.0
    %476 = vmatpush1.msra.mxu0 0.0
    %477 = vmatprep.subr.mxu0 0.0
    %478 = vmatpush1.msra.mxu0 0.0
    %479 = vmatprep.subr.mxu0 0.0
    %480 = vmatpush1.msra.mxu0 0.0
    %481 = vmatprep.subr.mxu0 0.0
    %482 = vmatpush1.msra.mxu0 %v383
    %483 = vmatprep.subr.mxu0 0.0
    %484 = vmatpush1.msra.mxu0 %v382
    %485 = vmatprep.subr.mxu0 0.0
    %486 = vmatpush1.msra.mxu0 %v381
    %487 = vmatprep.subr.mxu0 0.0
    %488 = vmatpush1.msra.mxu0 %v380
    %489 = vmatprep.subr.mxu0 0.0
    %490 = vmatpush1.msra.mxu0 %v379
    %491 = vmatprep.subr.mxu0 0.0
    %492 = vmatpush1.msra.mxu0 %v378
    %493 = vmatprep.subr.mxu0 0.0
    %494 = vmatpush1.msra.mxu0 %v377
    %495 = vmatprep.subr.mxu0 0.0
    %496 = vmatpush1.msra.mxu0 %v376
    %497 = vmatprep.subr.mxu0 0.0
    %498 = vmatpush2.msra.mxu0 0.0
    %499 = vmatprep.subr.mxu0 0.0
    %500 = vmatpush2.msra.mxu0 0.0
    %501 = vmatprep.subr.mxu0 0.0
    %502 = vmatpush2.msra.mxu0 0.0
    %503 = vmatprep.subr.mxu0 0.0
    %504 = vmatpush2.msra.mxu0 0.0
    %505 = vmatprep.subr.mxu0 0.0
    %506 = vmatpush2.msra.mxu0 0.0
    %507 = vmatprep.subr.mxu0 0.0
    %508 = vmatpush2.msra.mxu0 0.0
    %509 = vmatprep.subr.mxu0 0.0
    %510 = vmatpush2.msra.mxu0 0.0
    %511 = vmatprep.subr.mxu0 0.0
    %512 = vmatpush2.msra.mxu0 0.0
    %513 = vmatprep.subr.mxu0 0.0
    %514 = vmatpush2.msra.mxu0 0.0
    %515 = vmatprep.subr.mxu0 0.0
    %516 = vmatpush2.msra.mxu0 0.0
    %517 = vmatprep.subr.mxu0 0.0
    %518 = vmatpush2.msra.mxu0 0.0
    %519 = vmatprep.subr.mxu0 0.0
    %520 = vmatpush2.msra.mxu0 0.0
    %521 = vmatprep.subr.mxu0 0.0
    %522 = vmatpush2.msra.mxu0 0.0
    %523 = vmatprep.subr.mxu0 0.0
    %524 = vmatpush2.msra.mxu0 0.0
    %525 = vmatprep.subr.mxu0 0.0
    %526 = vmatpush2.msra.mxu0 0.0
    %527 = vmatprep.subr.mxu0 0.0
    %528 = vmatpush2.msra.mxu0 0.0
    %529 = vmatprep.mubr.f32.mxu0 0.0
    %530 = vmatmul.mubr.f32.gmra.mxu0 %v442
    %v531 = vpop.f32.mrf.mxu0
    %v532 = vadd.f32 %v403, %v531
    %v533 = vpop.f32.mrf.mxu0
    %534 = vmatprep.mubr.f32.mxu0 0.0
    %535 = vmatmul.mubr.f32.gmra.mxu0 %v445
    %v536 = vpop.f32.mrf.mxu0
    %v537 = vadd.f32 %v408, %v536
    %v538 = vpop.f32.mrf.mxu0
    %539 = vmatprep.mubr.f32.mxu0 0.0
    %540 = vmatmul.mubr.f32.gmra.mxu0 %v448
    %v541 = vpop.f32.mrf.mxu0
    %v542 = vadd.f32 %v413, %v541
    %v543 = vpop.f32.mrf.mxu0
    %544 = vmatprep.mubr.f32.mxu0 0.0
    %545 = vmatmul.mubr.f32.gmra.mxu0 %v451
    %v546 = vpop.f32.mrf.mxu0
    %v547 = vadd.f32 %v418, %v546
    %v548 = vpop.f32.mrf.mxu0
    %549 = vmatprep.mubr.f32.mxu0 0.0
    %550 = vmatmul.mubr.f32.gmra.mxu0 %v454
    %v551 = vpop.f32.mrf.mxu0
    %v552 = vadd.f32 %v423, %v551
    %v553 = vpop.f32.mrf.mxu0
    %554 = vmatprep.mubr.f32.mxu0 0.0
    %555 = vmatmul.mubr.f32.gmra.mxu0 %v457
    %v556 = vpop.f32.mrf.mxu0
    %v557 = vadd.f32 %v428, %v556
    %v558 = vpop.f32.mrf.mxu0
    %559 = vmatprep.mubr.f32.mxu0 0.0
    %560 = vmatmul.mubr.f32.gmra.mxu0 %v460
    %v561 = vpop.f32.mrf.mxu0
    %v562 = vadd.f32 %v433, %v561
    %v563 = vpop.f32.mrf.mxu0
    %564 = vmatprep.mubr.f32.mxu0 0.0
    %565 = vmatmul.mubr.f32.gmra.mxu0 %v463
    %v566 = vpop.f32.mrf.mxu0
    %v567 = vadd.f32 %v438, %v566
    %v568 = vpop.f32.mrf.mxu0
    %569 = vdwg.mxu0
    %v570 = vmax.f32 %v532, 0.0
    %v571 = vmax.f32 %v537, 0.0
    %v572 = vmax.f32 %v542, 0.0
    %v573 = vmax.f32 %v547, 0.0
    %v574 = vmax.f32 %v552, 0.0
    %v575 = vmax.f32 %v557, 0.0
    %v576 = vmax.f32 %v562, 0.0
    %v577 = vmax.f32 %v567, 0.0
    %v578 = vld [vmem:[%s7] sm:$0xff]
    %v579 = vld [vmem:[%s7 + $0x8] sm:$0xff]
    %v580 = vld [vmem:[%s7 + $0x10] sm:$0xff]
    %v581 = vld [vmem:[%s7 + $0x18] sm:$0xff]
    %v582 = vld [vmem:[%s7 + $0x20] sm:$0xff]
    %v583 = vld [vmem:[%s7 + $0x28] sm:$0xff]
    %v584 = vld [vmem:[%s7 + $0x30] sm:$0xff]
    %v585 = vld [vmem:[%s7 + $0x38] sm:$0xff]
    %587 = vset.pattern.permute.xlu0 0
    %588 = vperm.xlu0 %587, %v578
    %v589 = vpop.permute.xlu0 %588
    %592 = vset.pattern.permute.xlu0 0
    %593 = vperm.xlu0 %592, %v579
    %v594 = vpop.permute.xlu0 %593
    %597 = vset.pattern.permute.xlu0 0
    %598 = vperm.xlu0 %597, %v580
    %v599 = vpop.permute.xlu0 %598
    %602 = vset.pattern.permute.xlu0 0
    %603 = vperm.xlu0 %602, %v581
    %v604 = vpop.permute.xlu0 %603
    %607 = vset.pattern.permute.xlu0 0
    %608 = vperm.xlu0 %607, %v582
    %v609 = vpop.permute.xlu0 %608
    %612 = vset.pattern.permute.xlu0 0
    %613 = vperm.xlu0 %612, %v583
    %v614 = vpop.permute.xlu0 %613
    %617 = vset.pattern.permute.xlu0 0
    %618 = vperm.xlu0 %617, %v584
    %v619 = vpop.permute.xlu0 %618
    %622 = vset.pattern.permute.xlu0 0
    %623 = vperm.xlu0 %622, %v585
    %v624 = vpop.permute.xlu0 %623
    %v626 = vmul.f32 %v570, %v589
    %v627 = vmul.f32 %v571, %v594
    %v628 = vmul.f32 %v572, %v599
    %v629 = vmul.f32 %v573, %v604
    %v630 = vmul.f32 %v574, %v609
    %v631 = vmul.f32 %v575, %v614
    %v632 = vmul.f32 %v576, %v619
    %v633 = vmul.f32 %v577, %v624
    %vm634 = vcmask 64512
    %v635 = vsel %vm634, %v626, 0.0
    %v636 = vsel %vm634, %v627, 0.0
    %v637 = vadd.f32 %v635, %v636
    %v638 = vsel %vm634, %v628, 0.0
    %v639 = vadd.f32 %v637, %v638
    %v640 = vsel %vm634, %v629, 0.0
    %v641 = vadd.f32 %v639, %v640
    %v642 = vsel %vm634, %v630, 0.0
    %v643 = vadd.f32 %v641, %v642
    %v644 = vsel %vm634, %v631, 0.0
    %v645 = vadd.f32 %v643, %v644
    %v646 = vsel %vm634, %v632, 0.0
    %v647 = vadd.f32 %v645, %v646
    %v648 = vsel %vm634, %v633, 0.0
    %v649 = vadd.f32 %v647, %v648
    %v650 = vrot.slane %v649, 4
    %v651 = vadd.f32 %v649, %v650
    %v652 = vrot.slane %v651, 2
    %v653 = vadd.f32 %v651, %v652
    %v654 = vrot.slane %v653, 1
    %v655 = vadd.f32 %v653, %v654
    %s656 = sld [smem:[#allocation2]]
    %v657 = vstv %s656
    %v658 = vadd.f32 %v655, %v657
    %vm659 = vcmask 57344
    %660 = vst.msk [vmem:[#allocation3] sm:$0x1] %vm659, %v658
    // Predicated region
    $region38: #{tpu_custom_call.1} parent=1 // pred_check
      _
    $region39: #{tpu_custom_call.1} parent=1 // pred_check_branch
      %662 = sbr.rel (0) target = $region41
    $region40: #{tpu_custom_call.1} parent=1 // pred_region
      %s664 = ssub.s32 16, 16
      %665 = vsyncadd [#allocation4], %s664
      %s667 = sshll.u32 [#allocation3], 4
      %s668 = int_to_ptr.vmem [resolvable:$true] %s667
      %670 = dma.vmem_to_hbm [thread:$0]  %s668, 16, %s9, [#allocation4]
    $region41: #{tpu_custom_call.1} parent=1 // pred_fallthru
      _
    // Predicated region
    $region42: #{tpu_custom_call.1} parent=1 // pred_check
      _
    $region43: #{tpu_custom_call.1} parent=1 // pred_check_branch
      %672 = sbr.rel (0) target = $region45
    $region44: #{tpu_custom_call.1} parent=1 // pred_region
      %673 = dma.done [#allocation4], 16
    $region45: #{tpu_custom_call.1} parent=1 // pred_fallthru
      _
    %674 = vsyncpa [#allocation4], 1

</llo_original>
